<compile_context>
chip_gen: v6e
topology: v6e:2x2x1
jax: 0.10.0
libtpu: 0.0.40
codegen_flags: <defaults>
</compile_context>

<pallas_src>
import functools

import jax
import jax.numpy as jnp
from jax import lax
from jax.experimental import pallas as pl
from jax.experimental.pallas import tpu as pltpu


def _frac_encoder_kernel(xg_ref, pe_hi_ref, pe_lo_ref, out_ref, *,
                         resolution, log10, groups, chunk):
    # xg_ref      : (TG, g)          g fractional amounts packed per row (f32)
    # pe_hi/lo_ref: (g*R_pad, g*d2)  flat block-diagonal PE table, bf16 hi/lo
    # out_ref     : (TG, g*d2)       lane-dense output (g*d2 = 128 or 256)
    tg = out_ref.shape[0]
    r_pad = pe_hi_ref.shape[0] // groups

    # Column iota shared by every chunk / group (hoisted out of the loop --
    # JAX does not CSE broadcast_in_dim).
    r_iota = lax.broadcasted_iota(jnp.int32, (chunk, r_pad), 1)

    def frac_index(x):
        if log10:
            x = 0.0025 * jnp.log2(x) ** 2
            x = jnp.minimum(x, 1.0)                  # torch.clamp(max=1)
        x = jnp.maximum(x, 1.0 / resolution)         # torch.clamp(min=1/res)
        idx = jnp.round(x * resolution).astype(jnp.int32) - 1
        # jnp.take-style clamp; also guards garbage rows of the ragged tile.
        return jnp.clip(idx, 0, resolution - 1)

    def do_chunk(row0, rows, iota):
        sl = pl.ds(row0, rows)
        idx = frac_index(xg_ref[sl, :])              # (rows, g) int32
        # One lane-dense bf16 one-hot covering all g groups: segment k compares
        # the shared local iota against idx[:, k]; 0/1 are exact in bf16.
        segs = [(iota == idx[:, k:k + 1]).astype(jnp.float32).astype(jnp.bfloat16)
                for k in range(groups)]
        onehot = segs[0] if groups == 1 else jnp.concatenate(segs, axis=1)
        # Single fused contraction (K = g*R_pad): two native bf16 MXU passes
        # (hi + lo) accumulated in f32 -- no f32 matmul emulation, no per-group
        # accumulator adds.
        acc = jnp.dot(onehot, pe_hi_ref[...], preferred_element_type=jnp.float32)
        acc = acc + jnp.dot(onehot, pe_lo_ref[...], preferred_element_type=jnp.float32)
        out_ref[sl, :] = acc.astype(out_ref.dtype)

    n_full = tg // chunk
    tail = tg - n_full * chunk
    if n_full > 0:
        def body(i, carry):
            do_chunk(pl.multiple_of(i * chunk, chunk), chunk, r_iota)
            return carry
        lax.fori_loop(0, n_full, body, 0)
    if tail > 0:                                     # static; at most once/tile
        do_chunk(n_full * chunk, tail, r_iota[:tail, :])


def make_pe_table(d_model, resolution=100):
    """Deterministic PE buffer, identical to the torch __init__ construction."""
    d2 = d_model // 2
    xs = jnp.arange(resolution, dtype=jnp.float32).reshape(resolution, 1)
    frac = jnp.broadcast_to(
        jnp.arange(d2, dtype=jnp.float32).reshape(1, d2), (resolution, d2))
    pe = jnp.zeros((resolution, d2), dtype=jnp.float32)
    pe = pe.at[:, 0::2].set(jnp.sin(xs / jnp.power(50.0, 2.0 * frac[:, 0::2] / d2)))
    pe = pe.at[:, 1::2].set(jnp.cos(xs / jnp.power(50.0, 2.0 * frac[:, 1::2] / d2)))
    return pe


def make_flat_pe_hi_lo(pe, groups):
    """Flat block-diagonal PE table (groups*R_pad, groups*d2) with every group's
    row segment 128-aligned, split into a bf16 hi/lo pair so the one-hot gather
    runs as two native bf16 MXU passes."""
    r, d2 = pe.shape
    r_pad = -(-r // 128) * 128
    pe32 = pe.astype(jnp.float32)
    flat = jnp.zeros((groups * r_pad, groups * d2), jnp.float32)
    for k in range(groups):
        flat = flat.at[k * r_pad:k * r_pad + r, k * d2:(k + 1) * d2].set(pe32)
    hi = flat.astype(jnp.bfloat16)
    lo = (flat - hi.astype(jnp.float32)).astype(jnp.bfloat16)
    return hi, lo


def _default_out_lanes():
    # 256-lane packing feeds the full 256-wide MXU on v6e / v7x; keep 128 lanes
    # on v5e and older (128-wide MXU).
    try:
        kind = jax.devices()[0].device_kind.lower()
    except Exception:
        return 128
    return 256 if ("v6" in kind or "v7" in kind) else 128


def fractional_encode(x, pe, *, resolution=100, log10=False,
                      tokens_per_tile=32768, out_lanes=None,
                      out_dtype=jnp.float32):
    """Pallas-backed FractionalEncoder.forward.  x: (...,) -> (..., d_model//2)."""
    orig_shape = x.shape
    _, d2 = pe.shape

    # Pack g tokens per output row so stores are lane-dense (>= out_lanes wide).
    lanes = _default_out_lanes() if out_lanes is None else out_lanes
    if d2 > 0 and lanes % d2 == 0:
        g = lanes // d2
    elif d2 > 0 and 128 % d2 == 0:
        g = 128 // d2
    else:
        g = 1

    xf = x.reshape(-1).astype(jnp.float32)
    n = xf.shape[0]
    n_pad = -(-n // g) * g
    if n_pad != n:
        xf = jnp.pad(xf, (0, n_pad - n), constant_values=1.0)
    num_groups = n_pad // g
    xg = xf.reshape(num_groups, g)

    pe_hi, pe_lo = make_flat_pe_hi_lo(pe, g)
    r_pad = pe_hi.shape[0] // g

    # Sublane chunk per fori_loop step: sized so the live bf16 one-hot stays
    # <= ~16 vregs (chunk * g * r_pad <= 32768 elements), min 8, max 32.
    chunk = max(8, min(32, (32768 // (g * r_pad)) // 8 * 8))

    # HBM tile along the token-group axis (~tokens_per_tile tokens per step).
    tile_groups = max(chunk, (tokens_per_tile // g) // chunk * chunk)
    # Keep at least two grid steps when possible so the "parallel" axis can be
    # sharded across both TensorCores on v7x (harmless on v5e/v6e).
    if num_groups >= 2 * chunk:
        half = max(chunk, (num_groups // 2) // chunk * chunk)
        tile_groups = min(tile_groups, half)
    tg = min(tile_groups, num_groups)

    kernel = functools.partial(_frac_encoder_kernel, resolution=resolution,
                               log10=log10, groups=g, chunk=chunk)
    out = pl.pallas_call(
        kernel,
        out_shape=jax.ShapeDtypeStruct((num_groups, g * d2), out_dtype),
        grid=(pl.cdiv(num_groups, tg),),
        in_specs=[
            pl.BlockSpec((tg, g), lambda i: (i, 0)),
            pl.BlockSpec(pe_hi.shape, lambda i: (0, 0)),   # resident PE (hi)
            pl.BlockSpec(pe_lo.shape, lambda i: (0, 0)),   # resident PE (lo)
        ],
        out_specs=pl.BlockSpec((tg, g * d2), lambda i: (i, 0)),
        compiler_params=pltpu.CompilerParams(
            dimension_semantics=("parallel",)),
    )(xg, pe_hi, pe_lo)

    out = out.reshape(n_pad, d2)
    if n_pad != n:
        out = out[:n]
    return out.reshape(*orig_shape, d2)


def _reference(x, pe, *, resolution=100, log10=False):
    x = x.astype(jnp.float32)
    if log10:
        x = 0.0025 * jnp.log2(x) ** 2
        x = jnp.minimum(x, 1.0)
    x = jnp.maximum(x, 1.0 / resolution)
    idx = jnp.round(x * resolution).astype(jnp.int32) - 1
    return jnp.take(pe, idx, axis=0)


if __name__ == "__main__":
    d_model = 32        # -> pe has d_model // 2 = 16 features
    resolution = 100
    B, S = 2, 8

    pe = make_pe_table(d_model, resolution)

    key = jax.random.PRNGKey(0)
    # fractional amounts in (0, 1]
    x = jax.random.uniform(key, (B, S), dtype=jnp.float32, minval=0.005, maxval=1.0)

    out = fractional_encode(x, pe, resolution=resolution, log10=False)
    out = jax.block_until_ready(out)

    ref = _reference(x, pe, resolution=resolution, log10=False)
    assert out.shape == (B, S, d_model // 2)
    # 2-term bf16 hi/lo split of the PE table bounds the abs error at
    # ~2^-16 * |pe| ~= 1.5e-5 (|pe| <= 1), hence atol=2e-5.
    assert jnp.allclose(out, ref, atol=2e-5), "mismatch vs reference gather"

    print("KERNEL_OK")
</pallas_src>

<mosaic_0001>
module attributes {stable_mosaic.version = 11 : i64} {
  func.func @_frac_encoder_kernel(%arg0: i32, %arg1: memref<2x8xf32, #tpu.memory_space<vmem>>, %arg2: memref<1024x128xbf16, #tpu.memory_space<vmem>>, %arg3: memref<1024x128xbf16, #tpu.memory_space<vmem>>, %arg4: memref<2x128xf32, #tpu.memory_space<vmem>>) attributes {dimension_semantics = [#tpu.dimension_semantics<parallel>], iteration_bounds = array<i64: 1>, scalar_prefetch = 0 : i64, scratch_operands = 0 : i64, tpu.core_type = #tpu.core_type<tc>, window_params = [{transform_indices = @transform_0, window_bounds = array<i64: 2, 8>}, {pipeline_mode = #tpu.pipeline_mode<synchronous>, transform_indices = @transform_1, window_bounds = array<i64: 1024, 128>}, {pipeline_mode = #tpu.pipeline_mode<synchronous>, transform_indices = @transform_2, window_bounds = array<i64: 1024, 128>}, {transform_indices = @transform_3, window_bounds = array<i64: 2, 128>}]} {
    %0 = tpu.iota {dimensions = array<i32: 1>} : vector<32x128xi32>
    %1 = vector.extract_strided_slice %0 {offsets = [0, 0], sizes = [2, 128], strides = [1, 1]} : vector<32x128xi32> to vector<2x128xi32>
    %c0 = arith.constant 0 : index
    %c0_0 = arith.constant 0 : index
    %2 = vector.load %arg1[%c0, %c0_0] : memref<2x8xf32, #tpu.memory_space<vmem>>, vector<2x8xf32>
    %cst = arith.constant 0.00999999977 : f32
    %3 = vector.broadcast %cst : f32 to vector<2x8xf32>
    %4 = arith.maximumf %2, %3 : vector<2x8xf32>
    %cst_1 = arith.constant 1.000000e+02 : f32
    %5 = vector.broadcast %cst_1 : f32 to vector<2x8xf32>
    %6 = arith.mulf %4, %5 : vector<2x8xf32>
    %7 = math.roundeven %6 : vector<2x8xf32>
    %8 = arith.fptosi %7 : vector<2x8xf32> to vector<2x8xi32>
    %c1_i32 = arith.constant 1 : i32
    %9 = vector.broadcast %c1_i32 : i32 to vector<2x8xi32>
    %10 = arith.subi %8, %9 : vector<2x8xi32>
    %c0_i32 = arith.constant 0 : i32
    %c99_i32 = arith.constant 99 : i32
    %11 = vector.broadcast %c0_i32 : i32 to vector<2x8xi32>
    %12 = arith.maxsi %11, %10 : vector<2x8xi32>
    %13 = vector.broadcast %c99_i32 : i32 to vector<2x8xi32>
    %14 = arith.minsi %13, %12 : vector<2x8xi32>
    %15 = vector.extract_strided_slice %14 {offsets = [0, 0], sizes = [2, 1], strides = [1, 1]} : vector<2x8xi32> to vector<2x1xi32>
    %16 = vector.broadcast %15 : vector<2x1xi32> to vector<2x128xi32>
    %17 = arith.cmpi eq, %1, %16 : vector<2x128xi32>
    %18 = arith.extui %17 : vector<2x128xi1> to vector<2x128xi32>
    %19 = arith.sitofp %18 : vector<2x128xi32> to vector<2x128xf32>
    %20 = arith.truncf %19 : vector<2x128xf32> to vector<2x128xbf16>
    %21 = vector.extract_strided_slice %14 {offsets = [0, 1], sizes = [2, 1], strides = [1, 1]} : vector<2x8xi32> to vector<2x1xi32>
    %22 = vector.broadcast %21 : vector<2x1xi32> to vector<2x128xi32>
    %23 = arith.cmpi eq, %1, %22 : vector<2x128xi32>
    %24 = arith.extui %23 : vector<2x128xi1> to vector<2x128xi32>
    %25 = arith.sitofp %24 : vector<2x128xi32> to vector<2x128xf32>
    %26 = arith.truncf %25 : vector<2x128xf32> to vector<2x128xbf16>
    %27 = vector.extract_strided_slice %14 {offsets = [0, 2], sizes = [2, 1], strides = [1, 1]} : vector<2x8xi32> to vector<2x1xi32>
    %28 = vector.broadcast %27 : vector<2x1xi32> to vector<2x128xi32>
    %29 = arith.cmpi eq, %1, %28 : vector<2x128xi32>
    %30 = arith.extui %29 : vector<2x128xi1> to vector<2x128xi32>
    %31 = arith.sitofp %30 : vector<2x128xi32> to vector<2x128xf32>
    %32 = arith.truncf %31 : vector<2x128xf32> to vector<2x128xbf16>
    %33 = vector.extract_strided_slice %14 {offsets = [0, 3], sizes = [2, 1], strides = [1, 1]} : vector<2x8xi32> to vector<2x1xi32>
    %34 = vector.broadcast %33 : vector<2x1xi32> to vector<2x128xi32>
    %35 = arith.cmpi eq, %1, %34 : vector<2x128xi32>
    %36 = arith.extui %35 : vector<2x128xi1> to vector<2x128xi32>
    %37 = arith.sitofp %36 : vector<2x128xi32> to vector<2x128xf32>
    %38 = arith.truncf %37 : vector<2x128xf32> to vector<2x128xbf16>
    %39 = vector.extract_strided_slice %14 {offsets = [0, 4], sizes = [2, 1], strides = [1, 1]} : vector<2x8xi32> to vector<2x1xi32>
    %40 = vector.broadcast %39 : vector<2x1xi32> to vector<2x128xi32>
    %41 = arith.cmpi eq, %1, %40 : vector<2x128xi32>
    %42 = arith.extui %41 : vector<2x128xi1> to vector<2x128xi32>
    %43 = arith.sitofp %42 : vector<2x128xi32> to vector<2x128xf32>
    %44 = arith.truncf %43 : vector<2x128xf32> to vector<2x128xbf16>
    %45 = vector.extract_strided_slice %14 {offsets = [0, 5], sizes = [2, 1], strides = [1, 1]} : vector<2x8xi32> to vector<2x1xi32>
    %46 = vector.broadcast %45 : vector<2x1xi32> to vector<2x128xi32>
    %47 = arith.cmpi eq, %1, %46 : vector<2x128xi32>
    %48 = arith.extui %47 : vector<2x128xi1> to vector<2x128xi32>
    %49 = arith.sitofp %48 : vector<2x128xi32> to vector<2x128xf32>
    %50 = arith.truncf %49 : vector<2x128xf32> to vector<2x128xbf16>
    %51 = vector.extract_strided_slice %14 {offsets = [0, 6], sizes = [2, 1], strides = [1, 1]} : vector<2x8xi32> to vector<2x1xi32>
    %52 = vector.broadcast %51 : vector<2x1xi32> to vector<2x128xi32>
    %53 = arith.cmpi eq, %1, %52 : vector<2x128xi32>
    %54 = arith.extui %53 : vector<2x128xi1> to vector<2x128xi32>
    %55 = arith.sitofp %54 : vector<2x128xi32> to vector<2x128xf32>
    %56 = arith.truncf %55 : vector<2x128xf32> to vector<2x128xbf16>
    %57 = vector.extract_strided_slice %14 {offsets = [0, 7], sizes = [2, 1], strides = [1, 1]} : vector<2x8xi32> to vector<2x1xi32>
    %58 = vector.broadcast %57 : vector<2x1xi32> to vector<2x128xi32>
    %59 = arith.cmpi eq, %1, %58 : vector<2x128xi32>
    %60 = arith.extui %59 : vector<2x128xi1> to vector<2x128xi32>
    %61 = arith.sitofp %60 : vector<2x128xi32> to vector<2x128xf32>
    %62 = arith.truncf %61 : vector<2x128xf32> to vector<2x128xbf16>
    %63 = tpu.concatenate %20, %26, %32, %38, %44, %50, %56, %62 in 1 : vector<2x128xbf16>, vector<2x128xbf16>, vector<2x128xbf16>, vector<2x128xbf16>, vector<2x128xbf16>, vector<2x128xbf16>, vector<2x128xbf16>, vector<2x128xbf16> -> vector<2x1024xbf16>
    %c0_2 = arith.constant 0 : index
    %c0_3 = arith.constant 0 : index
    %64 = vector.load %arg2[%c0_2, %c0_3] : memref<1024x128xbf16, #tpu.memory_space<vmem>>, vector<1024x128xbf16>
    %cst_4 = arith.constant dense<0.000000e+00> : vector<2x128xf32>
    %65 = tpu.matmul %63, %64, %cst_4 {dimension_numbers = #tpu.dot_dimension_numbers<[1], [0], [0], [1], [0, 0, 1, 1], [], []>} : vector<2x1024xbf16>, vector<1024x128xbf16>, vector<2x128xf32> -> vector<2x128xf32>
    %c0_5 = arith.constant 0 : index
    %c0_6 = arith.constant 0 : index
    %66 = vector.load %arg3[%c0_5, %c0_6] : memref<1024x128xbf16, #tpu.memory_space<vmem>>, vector<1024x128xbf16>
    %cst_7 = arith.constant dense<0.000000e+00> : vector<2x128xf32>
    %67 = tpu.matmul %63, %66, %cst_7 {dimension_numbers = #tpu.dot_dimension_numbers<[1], [0], [0], [1], [0, 0, 1, 1], [], []>} : vector<2x1024xbf16>, vector<1024x128xbf16>, vector<2x128xf32> -> vector<2x128xf32>
    %68 = arith.addf %65, %67 : vector<2x128xf32>
    %c0_8 = arith.constant 0 : index
    %c0_9 = arith.constant 0 : index
    %69 = vector.load %arg4[%c0_8, %c0_9] : memref<2x128xf32, #tpu.memory_space<vmem>>, vector<2x128xf32>
    tpu.vector_store %arg4[%c0_8, %c0_9], %68 {strides = array<i32>} : memref<2x128xf32, #tpu.memory_space<vmem>>, vector<2x128xf32>,
    return
  }
  func.func @transform_0(%arg0: i32) -> (i32, i32) {
    %c0_i32 = arith.constant 0 : i32
    %c0_i32_0 = arith.constant 0 : i32
    return %arg0, %c0_i32 : i32, i32
  }
  func.func @transform_1(%arg0: i32) -> (i32, i32) {
    %c0_i32 = arith.constant 0 : i32
    %c0_i32_0 = arith.constant 0 : i32
    %c0_i32_1 = arith.constant 0 : i32
    return %c0_i32, %c0_i32_0 : i32, i32
  }
  func.func @transform_2(%arg0: i32) -> (i32, i32) {
    %c0_i32 = arith.constant 0 : i32
    %c0_i32_0 = arith.constant 0 : i32
    %c0_i32_1 = arith.constant 0 : i32
    return %c0_i32, %c0_i32_0 : i32, i32
  }
  func.func @transform_3(%arg0: i32) -> (i32, i32) {
    %c0_i32 = arith.constant 0 : i32
    %c0_i32_0 = arith.constant 0 : i32
    return %arg0, %c0_i32 : i32, i32
  }
}

</mosaic_0001>

<llo_original>
// kernel: tpu_custom_call.1
$region0: #{tpu_custom_call.1}
  #allocation0 [shape = 'u32[]', space=smem, size = 0x4, offset = 0x4, fixed_abs, tag = 'smem constant byte address 0x4 - core index']
  #allocation1 [shape = 'u32[144,128]{1,0:T(1,128)}', space=vmem, size = 0x12000, scoped, tag = 'internal scratch']
  %s0 = inlined_call_operand.hbm [shape: f32[2,8], index: 0, kind: input, shape index: {}]
  %s1 = inlined_call_operand.hbm [shape: bf16[1024,128], index: 1, kind: input, shape index: {}]
  %s2 = inlined_call_operand.hbm [shape: bf16[1024,128], index: 2, kind: input, shape index: {}]
  %s3 = inlined_call_operand.hbm [shape: f32[2,128], index: 3, kind: output, shape index: {}]
  %s4 = sld [smem:[#allocation0]]
  $region34: #{tpu_custom_call.1} parent=0
    _
  %s6 = ssub.s32 1, %s4
  %s7 = scalar_select 0, %s6, %s4
  $region1: #{tpu_custom_call.1} parent=0
    #allocation2 [shape = 'u8[1024]{0}', space=vmem, size = 0x400, scoped, tag = 'input window, operand 0, single buffered']
    #allocation3 [shape = 's32[1]{0}', space=sflag, size = 0x4, scoped, tag = 'scoped memory for tpu_custom_call.1']
    #allocation4 [shape = 's32[1]{0}', space=sflag, size = 0x4, scoped, tag = 'scoped memory for tpu_custom_call.1']
    #allocation5 [shape = 'u8[262144]{0}', space=vmem, size = 0x40000, scoped, tag = 'input window, operand 1, single buffered']
    #allocation6 [shape = 's32[1]{0}', space=sflag, size = 0x4, scoped, tag = 'scoped memory for tpu_custom_call.1']
    #allocation7 [shape = 'u8[262144]{0}', space=vmem, size = 0x40000, scoped, tag = 'input window, operand 2, single buffered']
    #allocation8 [shape = 'u8[1024]{0}', space=vmem, size = 0x400, scoped, tag = 'output window, operand 0, single buffered']
    %8 = vsyncpa [#allocation3], 0
    %9 = vsyncpa [#allocation6], 0
    %10 = vsyncpa [#allocation4], 0
    // Predicated region
    $region2: #{tpu_custom_call.1} parent=1 // pred_check
      _
    $region3: #{tpu_custom_call.1} parent=1 // pred_check_branch
      %12 = sbr.rel (0) target = $region5
    $region4: #{tpu_custom_call.1} parent=1 // pred_region
      %s14 = ssub.s32 32, 32
      %15 = vsyncadd [#allocation3], %s14
      %s17 = sshll.u32 [#allocation2], 4
      %s18 = int_to_ptr.vmem [resolvable:$true] %s17
      %20 = dma.hbm_to_vmem [thread:$0]  %s0, 32, %s18, [#allocation3]
    $region5: #{tpu_custom_call.1} parent=1 // pred_fallthru
      _
    // Predicated region
    $region6: #{tpu_custom_call.1} parent=1 // pred_check
      _
    $region7: #{tpu_custom_call.1} parent=1 // pred_check_branch
      %22 = sbr.rel (0) target = $region9
    $region8: #{tpu_custom_call.1} parent=1 // pred_region
      %s24 = ssub.s32 8192, 8192
      %25 = vsyncadd [#allocation6], %s24
      %s26 = sshll.u32 [#allocation5], 4
      %s27 = int_to_ptr.vmem [resolvable:$true] %s26
      %32 = dma.hbm_to_vmem [thread:$0]  %s1, 8192, %s27, [#allocation6], 64, 64, 4
    $region9: #{tpu_custom_call.1} parent=1 // pred_fallthru
      _
    // Predicated region
    $region10: #{tpu_custom_call.1} parent=1 // pred_check
      _
    $region11: #{tpu_custom_call.1} parent=1 // pred_check_branch
      %34 = sbr.rel (0) target = $region13
    $region12: #{tpu_custom_call.1} parent=1 // pred_region
      %s36 = ssub.s32 8192, 8192
      %37 = vsyncadd [#allocation6], %s36
      %s38 = sshll.u32 [#allocation7], 4
      %s39 = int_to_ptr.vmem [resolvable:$true] %s38
      %44 = dma.hbm_to_vmem [thread:$0]  %s2, 8192, %s39, [#allocation6], 64, 64, 4
    $region13: #{tpu_custom_call.1} parent=1 // pred_fallthru
      _
    // Predicated region
    $region14: #{tpu_custom_call.1} parent=1 // pred_check
      _
    $region15: #{tpu_custom_call.1} parent=1 // pred_check_branch
      %46 = sbr.rel (0) target = $region17
    $region16: #{tpu_custom_call.1} parent=1 // pred_region
      %47 = dma.done [#allocation3], 32
    $region17: #{tpu_custom_call.1} parent=1 // pred_fallthru
      _
    // Predicated region
    $region18: #{tpu_custom_call.1} parent=1 // pred_check
      _
    $region19: #{tpu_custom_call.1} parent=1 // pred_check_branch
      %49 = sbr.rel (0) target = $region21
    $region20: #{tpu_custom_call.1} parent=1 // pred_region
      %50 = dma.done [#allocation6], 8192
    $region21: #{tpu_custom_call.1} parent=1 // pred_fallthru
      _
    // Predicated region
    $region22: #{tpu_custom_call.1} parent=1 // pred_check
      _
    $region23: #{tpu_custom_call.1} parent=1 // pred_check_branch
      %52 = sbr.rel (0) target = $region25
    $region24: #{tpu_custom_call.1} parent=1 // pred_region
      %53 = dma.done [#allocation6], 8192
    $region25: #{tpu_custom_call.1} parent=1 // pred_fallthru
      _
    %v55 = vlaneseq
    %v56 = vand.u32 %v55, 127
    %v57 = vld [vmem:[#allocation2] sm:$0x3]
    %v58 = vmax.f32 %v57, 0.01
    %v59 = vmul.f32 %v58, 100.0
    %v60 = vcvt.f32.s32.ties.to.even %v59
    %v61 = vsub.s32 %v60, 1
    %vm62 = vcmp.gt.s32.totalorder %v61, 0
    %v63 = vsel %vm62, %v61, 0
    %vm64 = vcmp.lt.s32.totalorder %v63, 99
    %v65 = vsel %vm64, %v63, 99
    %66 = vset.pattern.permute.xlu0 0
    %67 = vperm.xlu0 %66, %v65
    %v68 = vpop.permute.xlu0 %67
    %vm69 = vcmp.eq.s32.totalorder %v56, %v68
    %v70 = vsel %vm69, 1, 0
    %v71 = vcvt.s32.f32 %v70
    %v72 = vpack.c.bf16 %v71, %v71
    %73 = vset.pattern.permute.xlu0 1
    %74 = vperm.xlu0 %73, %v65
    %v75 = vpop.permute.xlu0 %74
    %vm76 = vcmp.eq.s32.totalorder %v56, %v75
    %v77 = vsel %vm76, 1, 0
    %v78 = vcvt.s32.f32 %v77
    %v79 = vpack.c.bf16 %v78, %v78
    %80 = vset.pattern.permute.xlu0 2
    %81 = vperm.xlu0 %80, %v65
    %v82 = vpop.permute.xlu0 %81
    %vm83 = vcmp.eq.s32.totalorder %v56, %v82
    %v84 = vsel %vm83, 1, 0
    %v85 = vcvt.s32.f32 %v84
    %v86 = vpack.c.bf16 %v85, %v85
    %87 = vset.pattern.permute.xlu0 3
    %88 = vperm.xlu0 %87, %v65
    %v89 = vpop.permute.xlu0 %88
    %vm90 = vcmp.eq.s32.totalorder %v56, %v89
    %v91 = vsel %vm90, 1, 0
    %v92 = vcvt.s32.f32 %v91
    %v93 = vpack.c.bf16 %v92, %v92
    %94 = vset.pattern.permute.xlu0 4
    %95 = vperm.xlu0 %94, %v65
    %v96 = vpop.permute.xlu0 %95
    %vm97 = vcmp.eq.s32.totalorder %v56, %v96
    %v98 = vsel %vm97, 1, 0
    %v99 = vcvt.s32.f32 %v98
    %v100 = vpack.c.bf16 %v99, %v99
    %101 = vset.pattern.permute.xlu0 5
    %102 = vperm.xlu0 %101, %v65
    %v103 = vpop.permute.xlu0 %102
    %vm104 = vcmp.eq.s32.totalorder %v56, %v103
    %v105 = vsel %vm104, 1, 0
    %v106 = vcvt.s32.f32 %v105
    %v107 = vpack.c.bf16 %v106, %v106
    %108 = vset.pattern.permute.xlu0 6
    %109 = vperm.xlu0 %108, %v65
    %v110 = vpop.permute.xlu0 %109
    %vm111 = vcmp.eq.s32.totalorder %v56, %v110
    %v112 = vsel %vm111, 1, 0
    %v113 = vcvt.s32.f32 %v112
    %v114 = vpack.c.bf16 %v113, %v113
    %115 = vset.pattern.permute.xlu0 7
    %116 = vperm.xlu0 %115, %v65
    %v117 = vpop.permute.xlu0 %116
    %vm118 = vcmp.eq.s32.totalorder %v56, %v117
    %v119 = vsel %vm118, 1, 0
    %v120 = vcvt.s32.f32 %v119
    %v121 = vpack.c.bf16 %v120, %v120
    %v122 = vld [vmem:[#allocation5] sm:$0xf]
    %v123 = vld [vmem:[#allocation5 + $0x4] sm:$0xf]
    %v124 = vld [vmem:[#allocation5 + $0x8] sm:$0xf]
    %v125 = vld [vmem:[#allocation5 + $0xc] sm:$0xf]
    %v126 = vld [vmem:[#allocation5 + $0x10] sm:$0xf]
    %v127 = vld [vmem:[#allocation5 + $0x14] sm:$0xf]
    %v128 = vld [vmem:[#allocation5 + $0x18] sm:$0xf]
    %v129 = vld [vmem:[#allocation5 + $0x1c] sm:$0xf]
    %v130 = vld [vmem:[#allocation5 + $0x20] sm:$0xf]
    %v131 = vld [vmem:[#allocation5 + $0x24] sm:$0xf]
    %v132 = vld [vmem:[#allocation5 + $0x28] sm:$0xf]
    %v133 = vld [vmem:[#allocation5 + $0x2c] sm:$0xf]
    %v134 = vld [vmem:[#allocation5 + $0x30] sm:$0xf]
    %v135 = vld [vmem:[#allocation5 + $0x34] sm:$0xf]
    %v136 = vld [vmem:[#allocation5 + $0x38] sm:$0xf]
    %v137 = vld [vmem:[#allocation5 + $0x3c] sm:$0xf]
    %v138 = vld [vmem:[#allocation5 + $0x40] sm:$0xf]
    %v139 = vld [vmem:[#allocation5 + $0x44] sm:$0xf]
    %v140 = vld [vmem:[#allocation5 + $0x48] sm:$0xf]
    %v141 = vld [vmem:[#allocation5 + $0x4c] sm:$0xf]
    %v142 = vld [vmem:[#allocation5 + $0x50] sm:$0xf]
    %v143 = vld [vmem:[#allocation5 + $0x54] sm:$0xf]
    %v144 = vld [vmem:[#allocation5 + $0x58] sm:$0xf]
    %v145 = vld [vmem:[#allocation5 + $0x5c] sm:$0xf]
    %v146 = vld [vmem:[#allocation5 + $0x60] sm:$0xf]
    %v147 = vld [vmem:[#allocation5 + $0x64] sm:$0xf]
    %v148 = vld [vmem:[#allocation5 + $0x68] sm:$0xf]
    %v149 = vld [vmem:[#allocation5 + $0x6c] sm:$0xf]
    %v150 = vld [vmem:[#allocation5 + $0x70] sm:$0xf]
    %v151 = vld [vmem:[#allocation5 + $0x74] sm:$0xf]
    %v152 = vld [vmem:[#allocation5 + $0x78] sm:$0xf]
    %v153 = vld [vmem:[#allocation5 + $0x7c] sm:$0xf]
    %v154 = vld [vmem:[#allocation5 + $0x80] sm:$0xf]
    %v155 = vld [vmem:[#allocation5 + $0x84] sm:$0xf]
    %v156 = vld [vmem:[#allocation5 + $0x88] sm:$0xf]
    %v157 = vld [vmem:[#allocation5 + $0x8c] sm:$0xf]
    %v158 = vld [vmem:[#allocation5 + $0x90] sm:$0xf]
    %v159 = vld [vmem:[#allocation5 + $0x94] sm:$0xf]
    %v160 = vld [vmem:[#allocation5 + $0x98] sm:$0xf]
    %v161 = vld [vmem:[#allocation5 + $0x9c] sm:$0xf]
    %v162 = vld [vmem:[#allocation5 + $0xa0] sm:$0xf]
    %v163 = vld [vmem:[#allocation5 + $0xa4] sm:$0xf]
    %v164 = vld [vmem:[#allocation5 + $0xa8] sm:$0xf]
    %v165 = vld [vmem:[#allocation5 + $0xac] sm:$0xf]
    %v166 = vld [vmem:[#allocation5 + $0xb0] sm:$0xf]
    %v167 = vld [vmem:[#allocation5 + $0xb4] sm:$0xf]
    %v168 = vld [vmem:[#allocation5 + $0xb8] sm:$0xf]
    %v169 = vld [vmem:[#allocation5 + $0xbc] sm:$0xf]
    %v170 = vld [vmem:[#allocation5 + $0xc0] sm:$0xf]
    %v171 = vld [vmem:[#allocation5 + $0xc4] sm:$0xf]
    %v172 = vld [vmem:[#allocation5 + $0xc8] sm:$0xf]
    %v173 = vld [vmem:[#allocation5 + $0xcc] sm:$0xf]
    %v174 = vld [vmem:[#allocation5 + $0xd0] sm:$0xf]
    %v175 = vld [vmem:[#allocation5 + $0xd4] sm:$0xf]
    %v176 = vld [vmem:[#allocation5 + $0xd8] sm:$0xf]
    %v177 = vld [vmem:[#allocation5 + $0xdc] sm:$0xf]
    %v178 = vld [vmem:[#allocation5 + $0xe0] sm:$0xf]
    %v179 = vld [vmem:[#allocation5 + $0xe4] sm:$0xf]
    %v180 = vld [vmem:[#allocation5 + $0xe8] sm:$0xf]
    %v181 = vld [vmem:[#allocation5 + $0xec] sm:$0xf]
    %v182 = vld [vmem:[#allocation5 + $0xf0] sm:$0xf]
    %v183 = vld [vmem:[#allocation5 + $0xf4] sm:$0xf]
    %v184 = vld [vmem:[#allocation5 + $0xf8] sm:$0xf]
    %v185 = vld [vmem:[#allocation5 + $0xfc] sm:$0xf]
    %v186 = vld [vmem:[#allocation5 + $0x100] sm:$0xf]
    %v187 = vld [vmem:[#allocation5 + $0x104] sm:$0xf]
    %v188 = vld [vmem:[#allocation5 + $0x108] sm:$0xf]
    %v189 = vld [vmem:[#allocation5 + $0x10c] sm:$0xf]
    %v190 = vld [vmem:[#allocation5 + $0x110] sm:$0xf]
    %v191 = vld [vmem:[#allocation5 + $0x114] sm:$0xf]
    %v192 = vld [vmem:[#allocation5 + $0x118] sm:$0xf]
    %v193 = vld [vmem:[#allocation5 + $0x11c] sm:$0xf]
    %v194 = vld [vmem:[#allocation5 + $0x120] sm:$0xf]
    %v195 = vld [vmem:[#allocation5 + $0x124] sm:$0xf]
    %v196 = vld [vmem:[#allocation5 + $0x128] sm:$0xf]
    %v197 = vld [vmem:[#allocation5 + $0x12c] sm:$0xf]
    %v198 = vld [vmem:[#allocation5 + $0x130] sm:$0xf]
    %v199 = vld [vmem:[#allocation5 + $0x134] sm:$0xf]
    %v200 = vld [vmem:[#allocation5 + $0x138] sm:$0xf]
    %v201 = vld [vmem:[#allocation5 + $0x13c] sm:$0xf]
    %v202 = vld [vmem:[#allocation5 + $0x140] sm:$0xf]
    %v203 = vld [vmem:[#allocation5 + $0x144] sm:$0xf]
    %v204 = vld [vmem:[#allocation5 + $0x148] sm:$0xf]
    %v205 = vld [vmem:[#allocation5 + $0x14c] sm:$0xf]
    %v206 = vld [vmem:[#allocation5 + $0x150] sm:$0xf]
    %v207 = vld [vmem:[#allocation5 + $0x154] sm:$0xf]
    %v208 = vld [vmem:[#allocation5 + $0x158] sm:$0xf]
    %v209 = vld [vmem:[#allocation5 + $0x15c] sm:$0xf]
    %v210 = vld [vmem:[#allocation5 + $0x160] sm:$0xf]
    %v211 = vld [vmem:[#allocation5 + $0x164] sm:$0xf]
    %v212 = vld [vmem:[#allocation5 + $0x168] sm:$0xf]
    %v213 = vld [vmem:[#allocation5 + $0x16c] sm:$0xf]
    %v214 = vld [vmem:[#allocation5 + $0x170] sm:$0xf]
    %v215 = vld [vmem:[#allocation5 + $0x174] sm:$0xf]
    %v216 = vld [vmem:[#allocation5 + $0x178] sm:$0xf]
    %v217 = vld [vmem:[#allocation5 + $0x17c] sm:$0xf]
    %v218 = vld [vmem:[#allocation5 + $0x180] sm:$0xf]
    %v219 = vld [vmem:[#allocation5 + $0x184] sm:$0xf]
    %v220 = vld [vmem:[#allocation5 + $0x188] sm:$0xf]
    %v221 = vld [vmem:[#allocation5 + $0x18c] sm:$0xf]
    %v222 = vld [vmem:[#allocation5 + $0x190] sm:$0xf]
    %v223 = vld [vmem:[#allocation5 + $0x194] sm:$0xf]
    %v224 = vld [vmem:[#allocation5 + $0x198] sm:$0xf]
    %v225 = vld [vmem:[#allocation5 + $0x19c] sm:$0xf]
    %v226 = vld [vmem:[#allocation5 + $0x1a0] sm:$0xf]
    %v227 = vld [vmem:[#allocation5 + $0x1a4] sm:$0xf]
    %v228 = vld [vmem:[#allocation5 + $0x1a8] sm:$0xf]
    %v229 = vld [vmem:[#allocation5 + $0x1ac] sm:$0xf]
    %v230 = vld [vmem:[#allocation5 + $0x1b0] sm:$0xf]
    %v231 = vld [vmem:[#allocation5 + $0x1b4] sm:$0xf]
    %v232 = vld [vmem:[#allocation5 + $0x1b8] sm:$0xf]
    %v233 = vld [vmem:[#allocation5 + $0x1bc] sm:$0xf]
    %v234 = vld [vmem:[#allocation5 + $0x1c0] sm:$0xf]
    %v235 = vld [vmem:[#allocation5 + $0x1c4] sm:$0xf]
    %v236 = vld [vmem:[#allocation5 + $0x1c8] sm:$0xf]
    %v237 = vld [vmem:[#allocation5 + $0x1cc] sm:$0xf]
    %v238 = vld [vmem:[#allocation5 + $0x1d0] sm:$0xf]
    %v239 = vld [vmem:[#allocation5 + $0x1d4] sm:$0xf]
    %v240 = vld [vmem:[#allocation5 + $0x1d8] sm:$0xf]
    %v241 = vld [vmem:[#allocation5 + $0x1dc] sm:$0xf]
    %v242 = vld [vmem:[#allocation5 + $0x1e0] sm:$0xf]
    %v243 = vld [vmem:[#allocation5 + $0x1e4] sm:$0xf]
    %v244 = vld [vmem:[#allocation5 + $0x1e8] sm:$0xf]
    %v245 = vld [vmem:[#allocation5 + $0x1ec] sm:$0xf]
    %v246 = vld [vmem:[#allocation5 + $0x1f0] sm:$0xf]
    %v247 = vld [vmem:[#allocation5 + $0x1f4] sm:$0xf]
    %v248 = vld [vmem:[#allocation5 + $0x1f8] sm:$0xf]
    %v249 = vld [vmem:[#allocation5 + $0x1fc] sm:$0xf]
    %v250 = vld [vmem:[#allocation7] sm:$0xf]
    %v251 = vld [vmem:[#allocation7 + $0x4] sm:$0xf]
    %v252 = vld [vmem:[#allocation7 + $0x8] sm:$0xf]
    %v253 = vld [vmem:[#allocation7 + $0xc] sm:$0xf]
    %v254 = vld [vmem:[#allocation7 + $0x10] sm:$0xf]
    %v255 = vld [vmem:[#allocation7 + $0x14] sm:$0xf]
    %v256 = vld [vmem:[#allocation7 + $0x18] sm:$0xf]
    %v257 = vld [vmem:[#allocation7 + $0x1c] sm:$0xf]
    %v258 = vld [vmem:[#allocation7 + $0x20] sm:$0xf]
    %v259 = vld [vmem:[#allocation7 + $0x24] sm:$0xf]
    %v260 = vld [vmem:[#allocation7 + $0x28] sm:$0xf]
    %v261 = vld [vmem:[#allocation7 + $0x2c] sm:$0xf]
    %v262 = vld [vmem:[#allocation7 + $0x30] sm:$0xf]
    %v263 = vld [vmem:[#allocation7 + $0x34] sm:$0xf]
    %v264 = vld [vmem:[#allocation7 + $0x38] sm:$0xf]
    %v265 = vld [vmem:[#allocation7 + $0x3c] sm:$0xf]
    %v266 = vld [vmem:[#allocation7 + $0x40] sm:$0xf]
    %v267 = vld [vmem:[#allocation7 + $0x44] sm:$0xf]
    %v268 = vld [vmem:[#allocation7 + $0x48] sm:$0xf]
    %v269 = vld [vmem:[#allocation7 + $0x4c] sm:$0xf]
    %v270 = vld [vmem:[#allocation7 + $0x50] sm:$0xf]
    %v271 = vld [vmem:[#allocation7 + $0x54] sm:$0xf]
    %v272 = vld [vmem:[#allocation7 + $0x58] sm:$0xf]
    %v273 = vld [vmem:[#allocation7 + $0x5c] sm:$0xf]
    %v274 = vld [vmem:[#allocation7 + $0x60] sm:$0xf]
    %v275 = vld [vmem:[#allocation7 + $0x64] sm:$0xf]
    %v276 = vld [vmem:[#allocation7 + $0x68] sm:$0xf]
    %v277 = vld [vmem:[#allocation7 + $0x6c] sm:$0xf]
    %v278 = vld [vmem:[#allocation7 + $0x70] sm:$0xf]
    %v279 = vld [vmem:[#allocation7 + $0x74] sm:$0xf]
    %v280 = vld [vmem:[#allocation7 + $0x78] sm:$0xf]
    %v281 = vld [vmem:[#allocation7 + $0x7c] sm:$0xf]
    %v282 = vld [vmem:[#allocation7 + $0x80] sm:$0xf]
    %v283 = vld [vmem:[#allocation7 + $0x84] sm:$0xf]
    %v284 = vld [vmem:[#allocation7 + $0x88] sm:$0xf]
    %v285 = vld [vmem:[#allocation7 + $0x8c] sm:$0xf]
    %v286 = vld [vmem:[#allocation7 + $0x90] sm:$0xf]
    %v287 = vld [vmem:[#allocation7 + $0x94] sm:$0xf]
    %v288 = vld [vmem:[#allocation7 + $0x98] sm:$0xf]
    %v289 = vld [vmem:[#allocation7 + $0x9c] sm:$0xf]
    %v290 = vld [vmem:[#allocation7 + $0xa0] sm:$0xf]
    %v291 = vld [vmem:[#allocation7 + $0xa4] sm:$0xf]
    %v292 = vld [vmem:[#allocation7 + $0xa8] sm:$0xf]
    %v293 = vld [vmem:[#allocation7 + $0xac] sm:$0xf]
    %v294 = vld [vmem:[#allocation7 + $0xb0] sm:$0xf]
    %v295 = vld [vmem:[#allocation7 + $0xb4] sm:$0xf]
    %v296 = vld [vmem:[#allocation7 + $0xb8] sm:$0xf]
    %v297 = vld [vmem:[#allocation7 + $0xbc] sm:$0xf]
    %v298 = vld [vmem:[#allocation7 + $0xc0] sm:$0xf]
    %v299 = vld [vmem:[#allocation7 + $0xc4] sm:$0xf]
    %v300 = vld [vmem:[#allocation7 + $0xc8] sm:$0xf]
    %v301 = vld [vmem:[#allocation7 + $0xcc] sm:$0xf]
    %v302 = vld [vmem:[#allocation7 + $0xd0] sm:$0xf]
    %v303 = vld [vmem:[#allocation7 + $0xd4] sm:$0xf]
    %v304 = vld [vmem:[#allocation7 + $0xd8] sm:$0xf]
    %v305 = vld [vmem:[#allocation7 + $0xdc] sm:$0xf]
    %v306 = vld [vmem:[#allocation7 + $0xe0] sm:$0xf]
    %v307 = vld [vmem:[#allocation7 + $0xe4] sm:$0xf]
    %v308 = vld [vmem:[#allocation7 + $0xe8] sm:$0xf]
    %v309 = vld [vmem:[#allocation7 + $0xec] sm:$0xf]
    %v310 = vld [vmem:[#allocation7 + $0xf0] sm:$0xf]
    %v311 = vld [vmem:[#allocation7 + $0xf4] sm:$0xf]
    %v312 = vld [vmem:[#allocation7 + $0xf8] sm:$0xf]
    %v313 = vld [vmem:[#allocation7 + $0xfc] sm:$0xf]
    %v314 = vld [vmem:[#allocation7 + $0x100] sm:$0xf]
    %v315 = vld [vmem:[#allocation7 + $0x104] sm:$0xf]
    %v316 = vld [vmem:[#allocation7 + $0x108] sm:$0xf]
    %v317 = vld [vmem:[#allocation7 + $0x10c] sm:$0xf]
    %v318 = vld [vmem:[#allocation7 + $0x110] sm:$0xf]
    %v319 = vld [vmem:[#allocation7 + $0x114] sm:$0xf]
    %v320 = vld [vmem:[#allocation7 + $0x118] sm:$0xf]
    %v321 = vld [vmem:[#allocation7 + $0x11c] sm:$0xf]
    %v322 = vld [vmem:[#allocation7 + $0x120] sm:$0xf]
    %v323 = vld [vmem:[#allocation7 + $0x124] sm:$0xf]
    %v324 = vld [vmem:[#allocation7 + $0x128] sm:$0xf]
    %v325 = vld [vmem:[#allocation7 + $0x12c] sm:$0xf]
    %v326 = vld [vmem:[#allocation7 + $0x130] sm:$0xf]
    %v327 = vld [vmem:[#allocation7 + $0x134] sm:$0xf]
    %v328 = vld [vmem:[#allocation7 + $0x138] sm:$0xf]
    %v329 = vld [vmem:[#allocation7 + $0x13c] sm:$0xf]
    %v330 = vld [vmem:[#allocation7 + $0x140] sm:$0xf]
    %v331 = vld [vmem:[#allocation7 + $0x144] sm:$0xf]
    %v332 = vld [vmem:[#allocation7 + $0x148] sm:$0xf]
    %v333 = vld [vmem:[#allocation7 + $0x14c] sm:$0xf]
    %v334 = vld [vmem:[#allocation7 + $0x150] sm:$0xf]
    %v335 = vld [vmem:[#allocation7 + $0x154] sm:$0xf]
    %v336 = vld [vmem:[#allocation7 + $0x158] sm:$0xf]
    %v337 = vld [vmem:[#allocation7 + $0x15c] sm:$0xf]
    %v338 = vld [vmem:[#allocation7 + $0x160] sm:$0xf]
    %v339 = vld [vmem:[#allocation7 + $0x164] sm:$0xf]
    %v340 = vld [vmem:[#allocation7 + $0x168] sm:$0xf]
    %v341 = vld [vmem:[#allocation7 + $0x16c] sm:$0xf]
    %v342 = vld [vmem:[#allocation7 + $0x170] sm:$0xf]
    %v343 = vld [vmem:[#allocation7 + $0x174] sm:$0xf]
    %v344 = vld [vmem:[#allocation7 + $0x178] sm:$0xf]
    %v345 = vld [vmem:[#allocation7 + $0x17c] sm:$0xf]
    %v346 = vld [vmem:[#allocation7 + $0x180] sm:$0xf]
    %v347 = vld [vmem:[#allocation7 + $0x184] sm:$0xf]
    %v348 = vld [vmem:[#allocation7 + $0x188] sm:$0xf]
    %v349 = vld [vmem:[#allocation7 + $0x18c] sm:$0xf]
    %v350 = vld [vmem:[#allocation7 + $0x190] sm:$0xf]
    %v351 = vld [vmem:[#allocation7 + $0x194] sm:$0xf]
    %v352 = vld [vmem:[#allocation7 + $0x198] sm:$0xf]
    %v353 = vld [vmem:[#allocation7 + $0x19c] sm:$0xf]
    %v354 = vld [vmem:[#allocation7 + $0x1a0] sm:$0xf]
    %v355 = vld [vmem:[#allocation7 + $0x1a4] sm:$0xf]
    %v356 = vld [vmem:[#allocation7 + $0x1a8] sm:$0xf]
    %v357 = vld [vmem:[#allocation7 + $0x1ac] sm:$0xf]
    %v358 = vld [vmem:[#allocation7 + $0x1b0] sm:$0xf]
    %v359 = vld [vmem:[#allocation7 + $0x1b4] sm:$0xf]
    %v360 = vld [vmem:[#allocation7 + $0x1b8] sm:$0xf]
    %v361 = vld [vmem:[#allocation7 + $0x1bc] sm:$0xf]
    %v362 = vld [vmem:[#allocation7 + $0x1c0] sm:$0xf]
    %v363 = vld [vmem:[#allocation7 + $0x1c4] sm:$0xf]
    %v364 = vld [vmem:[#allocation7 + $0x1c8] sm:$0xf]
    %v365 = vld [vmem:[#allocation7 + $0x1cc] sm:$0xf]
    %v366 = vld [vmem:[#allocation7 + $0x1d0] sm:$0xf]
    %v367 = vld [vmem:[#allocation7 + $0x1d4] sm:$0xf]
    %v368 = vld [vmem:[#allocation7 + $0x1d8] sm:$0xf]
    %v369 = vld [vmem:[#allocation7 + $0x1dc] sm:$0xf]
    %v370 = vld [vmem:[#allocation7 + $0x1e0] sm:$0xf]
    %v371 = vld [vmem:[#allocation7 + $0x1e4] sm:$0xf]
    %v372 = vld [vmem:[#allocation7 + $0x1e8] sm:$0xf]
    %v373 = vld [vmem:[#allocation7 + $0x1ec] sm:$0xf]
    %v374 = vld [vmem:[#allocation7 + $0x1f0] sm:$0xf]
    %v375 = vld [vmem:[#allocation7 + $0x1f4] sm:$0xf]
    %v376 = vld [vmem:[#allocation7 + $0x1f8] sm:$0xf]
    %v377 = vld [vmem:[#allocation7 + $0x1fc] sm:$0xf]
    %v506 = vunpack.c.l.b16 %v250
    %v507 = vunpack.c.l.b16 %v251
    %v508 = vunpack.c.l.b16 %v252
    %v509 = vunpack.c.l.b16 %v253
    %v510 = vunpack.c.l.b16 %v254
    %v511 = vunpack.c.l.b16 %v255
    %v512 = vunpack.c.l.b16 %v256
    %v513 = vunpack.c.l.b16 %v257
    %v514 = vunpack.c.l.b16 %v258
    %v515 = vunpack.c.l.b16 %v259
    %v516 = vunpack.c.l.b16 %v260
    %v517 = vunpack.c.l.b16 %v261
    %v518 = vunpack.c.l.b16 %v262
    %v519 = vunpack.c.l.b16 %v263
    %v520 = vunpack.c.l.b16 %v264
    %v521 = vunpack.c.l.b16 %v265
    %v522 = vunpack.c.l.b16 %v266
    %v523 = vunpack.c.l.b16 %v267
    %v524 = vunpack.c.l.b16 %v268
    %v525 = vunpack.c.l.b16 %v269
    %v526 = vunpack.c.l.b16 %v270
    %v527 = vunpack.c.l.b16 %v271
    %v528 = vunpack.c.l.b16 %v272
    %v529 = vunpack.c.l.b16 %v273
    %v530 = vunpack.c.l.b16 %v274
    %v531 = vunpack.c.l.b16 %v275
    %v532 = vunpack.c.l.b16 %v276
    %v533 = vunpack.c.l.b16 %v277
    %v534 = vunpack.c.l.b16 %v278
    %v535 = vunpack.c.l.b16 %v279
    %v536 = vunpack.c.l.b16 %v280
    %v537 = vunpack.c.l.b16 %v281
    %v538 = vunpack.c.l.b16 %v282
    %v539 = vunpack.c.l.b16 %v283
    %v540 = vunpack.c.l.b16 %v284
    %v541 = vunpack.c.l.b16 %v285
    %v542 = vunpack.c.l.b16 %v286
    %v543 = vunpack.c.l.b16 %v287
    %v544 = vunpack.c.l.b16 %v288
    %v545 = vunpack.c.l.b16 %v289
    %v546 = vunpack.c.l.b16 %v290
    %v547 = vunpack.c.l.b16 %v291
    %v548 = vunpack.c.l.b16 %v292
    %v549 = vunpack.c.l.b16 %v293
    %v550 = vunpack.c.l.b16 %v294
    %v551 = vunpack.c.l.b16 %v295
    %v552 = vunpack.c.l.b16 %v296
    %v553 = vunpack.c.l.b16 %v297
    %v554 = vunpack.c.l.b16 %v298
    %v555 = vunpack.c.l.b16 %v299
    %v556 = vunpack.c.l.b16 %v300
    %v557 = vunpack.c.l.b16 %v301
    %v558 = vunpack.c.l.b16 %v302
    %v559 = vunpack.c.l.b16 %v303
    %v560 = vunpack.c.l.b16 %v304
    %v561 = vunpack.c.l.b16 %v305
    %v562 = vunpack.c.l.b16 %v306
    %v563 = vunpack.c.l.b16 %v307
    %v564 = vunpack.c.l.b16 %v308
    %v565 = vunpack.c.l.b16 %v309
    %v566 = vunpack.c.l.b16 %v310
    %v567 = vunpack.c.l.b16 %v311
    %v568 = vunpack.c.l.b16 %v312
    %v569 = vunpack.c.l.b16 %v313
    %v570 = vunpack.c.l.b16 %v314
    %v571 = vunpack.c.l.b16 %v315
    %v572 = vunpack.c.l.b16 %v316
    %v573 = vunpack.c.l.b16 %v317
    %v574 = vunpack.c.l.b16 %v318
    %v575 = vunpack.c.l.b16 %v319
    %v576 = vunpack.c.l.b16 %v320
    %v577 = vunpack.c.l.b16 %v321
    %v578 = vunpack.c.l.b16 %v322
    %v579 = vunpack.c.l.b16 %v323
    %v580 = vunpack.c.l.b16 %v324
    %v581 = vunpack.c.l.b16 %v325
    %v582 = vunpack.c.l.b16 %v326
    %v583 = vunpack.c.l.b16 %v327
    %v584 = vunpack.c.l.b16 %v328
    %v585 = vunpack.c.l.b16 %v329
    %v586 = vunpack.c.l.b16 %v330
    %v587 = vunpack.c.l.b16 %v331
    %v588 = vunpack.c.l.b16 %v332
    %v589 = vunpack.c.l.b16 %v333
    %v590 = vunpack.c.l.b16 %v334
    %v591 = vunpack.c.l.b16 %v335
    %v592 = vunpack.c.l.b16 %v336
    %v593 = vunpack.c.l.b16 %v337
    %v594 = vunpack.c.l.b16 %v338
    %v595 = vunpack.c.l.b16 %v339
    %v596 = vunpack.c.l.b16 %v340
    %v597 = vunpack.c.l.b16 %v341
    %v598 = vunpack.c.l.b16 %v342
    %v599 = vunpack.c.l.b16 %v343
    %v600 = vunpack.c.l.b16 %v344
    %v601 = vunpack.c.l.b16 %v345
    %v602 = vunpack.c.l.b16 %v346
    %v603 = vunpack.c.l.b16 %v347
    %v604 = vunpack.c.l.b16 %v348
    %v605 = vunpack.c.l.b16 %v349
    %v606 = vunpack.c.l.b16 %v350
    %v607 = vunpack.c.l.b16 %v351
    %v608 = vunpack.c.l.b16 %v352
    %v609 = vunpack.c.l.b16 %v353
    %v610 = vunpack.c.l.b16 %v354
    %v611 = vunpack.c.l.b16 %v355
    %v612 = vunpack.c.l.b16 %v356
    %v613 = vunpack.c.l.b16 %v357
    %v614 = vunpack.c.l.b16 %v358
    %v615 = vunpack.c.l.b16 %v359
    %v616 = vunpack.c.l.b16 %v360
    %v617 = vunpack.c.l.b16 %v361
    %v618 = vunpack.c.l.b16 %v362
    %v619 = vunpack.c.l.b16 %v363
    %v620 = vunpack.c.l.b16 %v364
    %v621 = vunpack.c.l.b16 %v365
    %v622 = vunpack.c.l.b16 %v366
    %v623 = vunpack.c.l.b16 %v367
    %v624 = vunpack.c.l.b16 %v368
    %v625 = vunpack.c.l.b16 %v369
    %v626 = vunpack.c.l.b16 %v370
    %v627 = vunpack.c.l.b16 %v371
    %v628 = vunpack.c.l.b16 %v372
    %v629 = vunpack.c.l.b16 %v373
    %v630 = vunpack.c.l.b16 %v374
    %v631 = vunpack.c.l.b16 %v375
    %v632 = vunpack.c.l.b16 %v376
    %v633 = vunpack.c.l.b16 %v377
    %v634 = vpack.c.b16 %v507, %v506
    %v635 = vpack.c.b16 %v509, %v508
    %v636 = vpack.c.b16 %v511, %v510
    %v637 = vpack.c.b16 %v513, %v512
    %v638 = vpack.c.b16 %v515, %v514
    %v639 = vpack.c.b16 %v517, %v516
    %v640 = vpack.c.b16 %v519, %v518
    %v641 = vpack.c.b16 %v521, %v520
    %v642 = vpack.c.b16 %v523, %v522
    %v643 = vpack.c.b16 %v525, %v524
    %v644 = vpack.c.b16 %v527, %v526
    %v645 = vpack.c.b16 %v529, %v528
    %v646 = vpack.c.b16 %v531, %v530
    %v647 = vpack.c.b16 %v533, %v532
    %v648 = vpack.c.b16 %v535, %v534
    %v649 = vpack.c.b16 %v537, %v536
    %v650 = vpack.c.b16 %v539, %v538
    %v651 = vpack.c.b16 %v541, %v540
    %v652 = vpack.c.b16 %v543, %v542
    %v653 = vpack.c.b16 %v545, %v544
    %v654 = vpack.c.b16 %v547, %v546
    %v655 = vpack.c.b16 %v549, %v548
    %v656 = vpack.c.b16 %v551, %v550
    %v657 = vpack.c.b16 %v553, %v552
    %v658 = vpack.c.b16 %v555, %v554
    %v659 = vpack.c.b16 %v557, %v556
    %v660 = vpack.c.b16 %v559, %v558
    %v661 = vpack.c.b16 %v561, %v560
    %v662 = vpack.c.b16 %v563, %v562
    %v663 = vpack.c.b16 %v565, %v564
    %v664 = vpack.c.b16 %v567, %v566
    %v665 = vpack.c.b16 %v569, %v568
    %v666 = vpack.c.b16 %v571, %v570
    %v667 = vpack.c.b16 %v573, %v572
    %v668 = vpack.c.b16 %v575, %v574
    %v669 = vpack.c.b16 %v577, %v576
    %v670 = vpack.c.b16 %v579, %v578
    %v671 = vpack.c.b16 %v581, %v580
    %v672 = vpack.c.b16 %v583, %v582
    %v673 = vpack.c.b16 %v585, %v584
    %v674 = vpack.c.b16 %v587, %v586
    %v675 = vpack.c.b16 %v589, %v588
    %v676 = vpack.c.b16 %v591, %v590
    %v677 = vpack.c.b16 %v593, %v592
    %v678 = vpack.c.b16 %v595, %v594
    %v679 = vpack.c.b16 %v597, %v596
    %v680 = vpack.c.b16 %v599, %v598
    %v681 = vpack.c.b16 %v601, %v600
    %v682 = vpack.c.b16 %v603, %v602
    %v683 = vpack.c.b16 %v605, %v604
    %v684 = vpack.c.b16 %v607, %v606
    %v685 = vpack.c.b16 %v609, %v608
    %v686 = vpack.c.b16 %v611, %v610
    %v687 = vpack.c.b16 %v613, %v612
    %v688 = vpack.c.b16 %v615, %v614
    %v689 = vpack.c.b16 %v617, %v616
    %v690 = vpack.c.b16 %v619, %v618
    %v691 = vpack.c.b16 %v621, %v620
    %v692 = vpack.c.b16 %v623, %v622
    %v693 = vpack.c.b16 %v625, %v624
    %v694 = vpack.c.b16 %v627, %v626
    %v695 = vpack.c.b16 %v629, %v628
    %v696 = vpack.c.b16 %v631, %v630
    %v697 = vpack.c.b16 %v633, %v632
    %762 = vmatprep.subr.bf16.mxu0 0
    %763 = vmatpush1.bf16.msra.mxu0 %v641
    %764 = vmatprep.subr.bf16.mxu0 0
    %765 = vmatpush1.bf16.msra.mxu0 %v640
    %766 = vmatprep.subr.bf16.mxu0 0
    %767 = vmatpush1.bf16.msra.mxu0 %v639
    %768 = vmatprep.subr.bf16.mxu0 0
    %769 = vmatpush1.bf16.msra.mxu0 %v638
    %770 = vmatprep.subr.bf16.mxu0 0
    %771 = vmatpush1.bf16.msra.mxu0 %v637
    %772 = vmatprep.subr.bf16.mxu0 0
    %773 = vmatpush1.bf16.msra.mxu0 %v636
    %774 = vmatprep.subr.bf16.mxu0 0
    %775 = vmatpush1.bf16.msra.mxu0 %v635
    %776 = vmatprep.subr.bf16.mxu0 0
    %777 = vmatpush1.bf16.msra.mxu0 %v634
    %778 = vmatprep.subr.bf16.mxu0 0
    %779 = vmatpush2.bf16.msra.mxu0 %v649
    %780 = vmatprep.subr.bf16.mxu0 0
    %781 = vmatpush2.bf16.msra.mxu0 %v648
    %782 = vmatprep.subr.bf16.mxu0 0
    %783 = vmatpush2.bf16.msra.mxu0 %v647
    %784 = vmatprep.subr.bf16.mxu0 0
    %785 = vmatpush2.bf16.msra.mxu0 %v646
    %786 = vmatprep.subr.bf16.mxu0 0
    %787 = vmatpush2.bf16.msra.mxu0 %v645
    %788 = vmatprep.subr.bf16.mxu0 0
    %789 = vmatpush2.bf16.msra.mxu0 %v644
    %790 = vmatprep.subr.bf16.mxu0 0
    %791 = vmatpush2.bf16.msra.mxu0 %v643
    %792 = vmatprep.subr.bf16.mxu0 0
    %793 = vmatpush2.bf16.msra.mxu0 %v642
    %794 = vmatprep.mubr.bf16.mxu0 %v79
    %795 = vmatmul.mubr.bf16.gmra.mxu0 %v72
    %v796 = vpop.f32.mrf.mxu0
    %v797 = vadd.f32 0.0, %v796
    %v798 = vpop.f32.mrf.mxu0
    %v799 = vpop.f32.mrf.mxu0
    %v800 = vpop.f32.mrf.mxu0
    %801 = vdwg.mxu0
    %802 = vmatprep.subr.bf16.mxu0 0
    %803 = vmatpush1.bf16.msra.mxu0 %v657
    %804 = vmatprep.subr.bf16.mxu0 0
    %805 = vmatpush1.bf16.msra.mxu0 %v656
    %806 = vmatprep.subr.bf16.mxu0 0
    %807 = vmatpush1.bf16.msra.mxu0 %v655
    %808 = vmatprep.subr.bf16.mxu0 0
    %809 = vmatpush1.bf16.msra.mxu0 %v654
    %810 = vmatprep.subr.bf16.mxu0 0
    %811 = vmatpush1.bf16.msra.mxu0 %v653
    %812 = vmatprep.subr.bf16.mxu0 0
    %813 = vmatpush1.bf16.msra.mxu0 %v652
    %814 = vmatprep.subr.bf16.mxu0 0
    %815 = vmatpush1.bf16.msra.mxu0 %v651
    %816 = vmatprep.subr.bf16.mxu0 0
    %817 = vmatpush1.bf16.msra.mxu0 %v650
    %818 = vmatprep.subr.bf16.mxu0 0
    %819 = vmatpush2.bf16.msra.mxu0 %v665
    %820 = vmatprep.subr.bf16.mxu0 0
    %821 = vmatpush2.bf16.msra.mxu0 %v664
    %822 = vmatprep.subr.bf16.mxu0 0
    %823 = vmatpush2.bf16.msra.mxu0 %v663
    %824 = vmatprep.subr.bf16.mxu0 0
    %825 = vmatpush2.bf16.msra.mxu0 %v662
    %826 = vmatprep.subr.bf16.mxu0 0
    %827 = vmatpush2.bf16.msra.mxu0 %v661
    %828 = vmatprep.subr.bf16.mxu0 0
    %829 = vmatpush2.bf16.msra.mxu0 %v660
    %830 = vmatprep.subr.bf16.mxu0 0
    %831 = vmatpush2.bf16.msra.mxu0 %v659
    %832 = vmatprep.subr.bf16.mxu0 0
    %833 = vmatpush2.bf16.msra.mxu0 %v658
    %834 = vmatprep.mubr.bf16.mxu0 %v93
    %835 = vmatmul.mubr.bf16.gmra.mxu0 %v86
    %v836 = vpop.f32.mrf.mxu0
    %v837 = vadd.f32 %v797, %v836
    %v838 = vpop.f32.mrf.mxu0
    %v839 = vpop.f32.mrf.mxu0
    %v840 = vpop.f32.mrf.mxu0
    %841 = vdwg.mxu0
    %842 = vmatprep.subr.bf16.mxu0 0
    %843 = vmatpush1.bf16.msra.mxu0 %v673
    %844 = vmatprep.subr.bf16.mxu0 0
    %845 = vmatpush1.bf16.msra.mxu0 %v672
    %846 = vmatprep.subr.bf16.mxu0 0
    %847 = vmatpush1.bf16.msra.mxu0 %v671
    %848 = vmatprep.subr.bf16.mxu0 0
    %849 = vmatpush1.bf16.msra.mxu0 %v670
    %850 = vmatprep.subr.bf16.mxu0 0
    %851 = vmatpush1.bf16.msra.mxu0 %v669
    %852 = vmatprep.subr.bf16.mxu0 0
    %853 = vmatpush1.bf16.msra.mxu0 %v668
    %854 = vmatprep.subr.bf16.mxu0 0
    %855 = vmatpush1.bf16.msra.mxu0 %v667
    %856 = vmatprep.subr.bf16.mxu0 0
    %857 = vmatpush1.bf16.msra.mxu0 %v666
    %858 = vmatprep.subr.bf16.mxu0 0
    %859 = vmatpush2.bf16.msra.mxu0 %v681
    %860 = vmatprep.subr.bf16.mxu0 0
    %861 = vmatpush2.bf16.msra.mxu0 %v680
    %862 = vmatprep.subr.bf16.mxu0 0
    %863 = vmatpush2.bf16.msra.mxu0 %v679
    %864 = vmatprep.subr.bf16.mxu0 0
    %865 = vmatpush2.bf16.msra.mxu0 %v678
    %866 = vmatprep.subr.bf16.mxu0 0
    %867 = vmatpush2.bf16.msra.mxu0 %v677
    %868 = vmatprep.subr.bf16.mxu0 0
    %869 = vmatpush2.bf16.msra.mxu0 %v676
    %870 = vmatprep.subr.bf16.mxu0 0
    %871 = vmatpush2.bf16.msra.mxu0 %v675
    %872 = vmatprep.subr.bf16.mxu0 0
    %873 = vmatpush2.bf16.msra.mxu0 %v674
    %874 = vmatprep.mubr.bf16.mxu0 %v107
    %875 = vmatmul.mubr.bf16.gmra.mxu0 %v100
    %v876 = vpop.f32.mrf.mxu0
    %v877 = vadd.f32 %v837, %v876
    %v878 = vpop.f32.mrf.mxu0
    %v879 = vpop.f32.mrf.mxu0
    %v880 = vpop.f32.mrf.mxu0
    %881 = vdwg.mxu0
    %882 = vmatprep.subr.bf16.mxu0 0
    %883 = vmatpush1.bf16.msra.mxu0 %v689
    %884 = vmatprep.subr.bf16.mxu0 0
    %885 = vmatpush1.bf16.msra.mxu0 %v688
    %886 = vmatprep.subr.bf16.mxu0 0
    %887 = vmatpush1.bf16.msra.mxu0 %v687
    %888 = vmatprep.subr.bf16.mxu0 0
    %889 = vmatpush1.bf16.msra.mxu0 %v686
    %890 = vmatprep.subr.bf16.mxu0 0
    %891 = vmatpush1.bf16.msra.mxu0 %v685
    %892 = vmatprep.subr.bf16.mxu0 0
    %893 = vmatpush1.bf16.msra.mxu0 %v684
    %894 = vmatprep.subr.bf16.mxu0 0
    %895 = vmatpush1.bf16.msra.mxu0 %v683
    %896 = vmatprep.subr.bf16.mxu0 0
    %897 = vmatpush1.bf16.msra.mxu0 %v682
    %898 = vmatprep.subr.bf16.mxu0 0
    %899 = vmatpush2.bf16.msra.mxu0 %v697
    %900 = vmatprep.subr.bf16.mxu0 0
    %901 = vmatpush2.bf16.msra.mxu0 %v696
    %902 = vmatprep.subr.bf16.mxu0 0
    %903 = vmatpush2.bf16.msra.mxu0 %v695
    %904 = vmatprep.subr.bf16.mxu0 0
    %905 = vmatpush2.bf16.msra.mxu0 %v694
    %906 = vmatprep.subr.bf16.mxu0 0
    %907 = vmatpush2.bf16.msra.mxu0 %v693
    %908 = vmatprep.subr.bf16.mxu0 0
    %909 = vmatpush2.bf16.msra.mxu0 %v692
    %910 = vmatprep.subr.bf16.mxu0 0
    %911 = vmatpush2.bf16.msra.mxu0 %v691
    %912 = vmatprep.subr.bf16.mxu0 0
    %913 = vmatpush2.bf16.msra.mxu0 %v690
    %914 = vmatprep.mubr.bf16.mxu0 %v121
    %915 = vmatmul.mubr.bf16.gmra.mxu0 %v114
    %v916 = vpop.f32.mrf.mxu0
    %v917 = vadd.f32 %v877, %v916
    %v918 = vpop.f32.mrf.mxu0
    %v919 = vpop.f32.mrf.mxu0
    %v920 = vpop.f32.mrf.mxu0
    %921 = vdwg.mxu0
    %v1050 = vunpack.c.l.b16 %v122
    %v1051 = vunpack.c.l.b16 %v123
    %v1052 = vunpack.c.l.b16 %v124
    %v1053 = vunpack.c.l.b16 %v125
    %v1054 = vunpack.c.l.b16 %v126
    %v1055 = vunpack.c.l.b16 %v127
    %v1056 = vunpack.c.l.b16 %v128
    %v1057 = vunpack.c.l.b16 %v129
    %v1058 = vunpack.c.l.b16 %v130
    %v1059 = vunpack.c.l.b16 %v131
    %v1060 = vunpack.c.l.b16 %v132
    %v1061 = vunpack.c.l.b16 %v133
    %v1062 = vunpack.c.l.b16 %v134
    %v1063 = vunpack.c.l.b16 %v135
    %v1064 = vunpack.c.l.b16 %v136
    %v1065 = vunpack.c.l.b16 %v137
    %v1066 = vunpack.c.l.b16 %v138
    %v1067 = vunpack.c.l.b16 %v139
    %v1068 = vunpack.c.l.b16 %v140
    %v1069 = vunpack.c.l.b16 %v141
    %v1070 = vunpack.c.l.b16 %v142
    %v1071 = vunpack.c.l.b16 %v143
    %v1072 = vunpack.c.l.b16 %v144
    %v1073 = vunpack.c.l.b16 %v145
    %v1074 = vunpack.c.l.b16 %v146
    %v1075 = vunpack.c.l.b16 %v147
    %v1076 = vunpack.c.l.b16 %v148
    %v1077 = vunpack.c.l.b16 %v149
    %v1078 = vunpack.c.l.b16 %v150
    %v1079 = vunpack.c.l.b16 %v151
    %v1080 = vunpack.c.l.b16 %v152
    %v1081 = vunpack.c.l.b16 %v153
    %v1082 = vunpack.c.l.b16 %v154
    %v1083 = vunpack.c.l.b16 %v155
    %v1084 = vunpack.c.l.b16 %v156
    %v1085 = vunpack.c.l.b16 %v157
    %v1086 = vunpack.c.l.b16 %v158
    %v1087 = vunpack.c.l.b16 %v159
    %v1088 = vunpack.c.l.b16 %v160
    %v1089 = vunpack.c.l.b16 %v161
    %v1090 = vunpack.c.l.b16 %v162
    %v1091 = vunpack.c.l.b16 %v163
    %v1092 = vunpack.c.l.b16 %v164
    %v1093 = vunpack.c.l.b16 %v165
    %v1094 = vunpack.c.l.b16 %v166
    %v1095 = vunpack.c.l.b16 %v167
    %v1096 = vunpack.c.l.b16 %v168
    %v1097 = vunpack.c.l.b16 %v169
    %v1098 = vunpack.c.l.b16 %v170
    %v1099 = vunpack.c.l.b16 %v171
    %v1100 = vunpack.c.l.b16 %v172
    %v1101 = vunpack.c.l.b16 %v173
    %v1102 = vunpack.c.l.b16 %v174
    %v1103 = vunpack.c.l.b16 %v175
    %v1104 = vunpack.c.l.b16 %v176
    %v1105 = vunpack.c.l.b16 %v177
    %v1106 = vunpack.c.l.b16 %v178
    %v1107 = vunpack.c.l.b16 %v179
    %v1108 = vunpack.c.l.b16 %v180
    %v1109 = vunpack.c.l.b16 %v181
    %v1110 = vunpack.c.l.b16 %v182
    %v1111 = vunpack.c.l.b16 %v183
    %v1112 = vunpack.c.l.b16 %v184
    %v1113 = vunpack.c.l.b16 %v185
    %v1114 = vunpack.c.l.b16 %v186
    %v1115 = vunpack.c.l.b16 %v187
    %v1116 = vunpack.c.l.b16 %v188
    %v1117 = vunpack.c.l.b16 %v189
    %v1118 = vunpack.c.l.b16 %v190
    %v1119 = vunpack.c.l.b16 %v191
    %v1120 = vunpack.c.l.b16 %v192
    %v1121 = vunpack.c.l.b16 %v193
    %v1122 = vunpack.c.l.b16 %v194
    %v1123 = vunpack.c.l.b16 %v195
    %v1124 = vunpack.c.l.b16 %v196
    %v1125 = vunpack.c.l.b16 %v197
    %v1126 = vunpack.c.l.b16 %v198
    %v1127 = vunpack.c.l.b16 %v199
    %v1128 = vunpack.c.l.b16 %v200
    %v1129 = vunpack.c.l.b16 %v201
    %v1130 = vunpack.c.l.b16 %v202
    %v1131 = vunpack.c.l.b16 %v203
    %v1132 = vunpack.c.l.b16 %v204
    %v1133 = vunpack.c.l.b16 %v205
    %v1134 = vunpack.c.l.b16 %v206
    %v1135 = vunpack.c.l.b16 %v207
    %v1136 = vunpack.c.l.b16 %v208
    %v1137 = vunpack.c.l.b16 %v209
    %v1138 = vunpack.c.l.b16 %v210
    %v1139 = vunpack.c.l.b16 %v211
    %v1140 = vunpack.c.l.b16 %v212
    %v1141 = vunpack.c.l.b16 %v213
    %v1142 = vunpack.c.l.b16 %v214
    %v1143 = vunpack.c.l.b16 %v215
    %v1144 = vunpack.c.l.b16 %v216
    %v1145 = vunpack.c.l.b16 %v217
    %v1146 = vunpack.c.l.b16 %v218
    %v1147 = vunpack.c.l.b16 %v219
    %v1148 = vunpack.c.l.b16 %v220
    %v1149 = vunpack.c.l.b16 %v221
    %v1150 = vunpack.c.l.b16 %v222
    %v1151 = vunpack.c.l.b16 %v223
    %v1152 = vunpack.c.l.b16 %v224
    %v1153 = vunpack.c.l.b16 %v225
    %v1154 = vunpack.c.l.b16 %v226
    %v1155 = vunpack.c.l.b16 %v227
    %v1156 = vunpack.c.l.b16 %v228
    %v1157 = vunpack.c.l.b16 %v229
    %v1158 = vunpack.c.l.b16 %v230
    %v1159 = vunpack.c.l.b16 %v231
    %v1160 = vunpack.c.l.b16 %v232
    %v1161 = vunpack.c.l.b16 %v233
    %v1162 = vunpack.c.l.b16 %v234
    %v1163 = vunpack.c.l.b16 %v235
    %v1164 = vunpack.c.l.b16 %v236
    %v1165 = vunpack.c.l.b16 %v237
    %v1166 = vunpack.c.l.b16 %v238
    %v1167 = vunpack.c.l.b16 %v239
    %v1168 = vunpack.c.l.b16 %v240
    %v1169 = vunpack.c.l.b16 %v241
    %v1170 = vunpack.c.l.b16 %v242
    %v1171 = vunpack.c.l.b16 %v243
    %v1172 = vunpack.c.l.b16 %v244
    %v1173 = vunpack.c.l.b16 %v245
    %v1174 = vunpack.c.l.b16 %v246
    %v1175 = vunpack.c.l.b16 %v247
    %v1176 = vunpack.c.l.b16 %v248
    %v1177 = vunpack.c.l.b16 %v249
    %v1178 = vpack.c.b16 %v1051, %v1050
    %v1179 = vpack.c.b16 %v1053, %v1052
    %v1180 = vpack.c.b16 %v1055, %v1054
    %v1181 = vpack.c.b16 %v1057, %v1056
    %v1182 = vpack.c.b16 %v1059, %v1058
    %v1183 = vpack.c.b16 %v1061, %v1060
    %v1184 = vpack.c.b16 %v1063, %v1062
    %v1185 = vpack.c.b16 %v1065, %v1064
    %v1186 = vpack.c.b16 %v1067, %v1066
    %v1187 = vpack.c.b16 %v1069, %v1068
    %v1188 = vpack.c.b16 %v1071, %v1070
    %v1189 = vpack.c.b16 %v1073, %v1072
    %v1190 = vpack.c.b16 %v1075, %v1074
    %v1191 = vpack.c.b16 %v1077, %v1076
    %v1192 = vpack.c.b16 %v1079, %v1078
    %v1193 = vpack.c.b16 %v1081, %v1080
    %v1194 = vpack.c.b16 %v1083, %v1082
    %v1195 = vpack.c.b16 %v1085, %v1084
    %v1196 = vpack.c.b16 %v1087, %v1086
    %v1197 = vpack.c.b16 %v1089, %v1088
    %v1198 = vpack.c.b16 %v1091, %v1090
    %v1199 = vpack.c.b16 %v1093, %v1092
    %v1200 = vpack.c.b16 %v1095, %v1094
    %v1201 = vpack.c.b16 %v1097, %v1096
    %v1202 = vpack.c.b16 %v1099, %v1098
    %v1203 = vpack.c.b16 %v1101, %v1100
    %v1204 = vpack.c.b16 %v1103, %v1102
    %v1205 = vpack.c.b16 %v1105, %v1104
    %v1206 = vpack.c.b16 %v1107, %v1106
    %v1207 = vpack.c.b16 %v1109, %v1108
    %v1208 = vpack.c.b16 %v1111, %v1110
    %v1209 = vpack.c.b16 %v1113, %v1112
    %v1210 = vpack.c.b16 %v1115, %v1114
    %v1211 = vpack.c.b16 %v1117, %v1116
    %v1212 = vpack.c.b16 %v1119, %v1118
    %v1213 = vpack.c.b16 %v1121, %v1120
    %v1214 = vpack.c.b16 %v1123, %v1122
    %v1215 = vpack.c.b16 %v1125, %v1124
    %v1216 = vpack.c.b16 %v1127, %v1126
    %v1217 = vpack.c.b16 %v1129, %v1128
    %v1218 = vpack.c.b16 %v1131, %v1130
    %v1219 = vpack.c.b16 %v1133, %v1132
    %v1220 = vpack.c.b16 %v1135, %v1134
    %v1221 = vpack.c.b16 %v1137, %v1136
    %v1222 = vpack.c.b16 %v1139, %v1138
    %v1223 = vpack.c.b16 %v1141, %v1140
    %v1224 = vpack.c.b16 %v1143, %v1142
    %v1225 = vpack.c.b16 %v1145, %v1144
    %v1226 = vpack.c.b16 %v1147, %v1146
    %v1227 = vpack.c.b16 %v1149, %v1148
    %v1228 = vpack.c.b16 %v1151, %v1150
    %v1229 = vpack.c.b16 %v1153, %v1152
    %v1230 = vpack.c.b16 %v1155, %v1154
    %v1231 = vpack.c.b16 %v1157, %v1156
    %v1232 = vpack.c.b16 %v1159, %v1158
    %v1233 = vpack.c.b16 %v1161, %v1160
    %v1234 = vpack.c.b16 %v1163, %v1162
    %v1235 = vpack.c.b16 %v1165, %v1164
    %v1236 = vpack.c.b16 %v1167, %v1166
    %v1237 = vpack.c.b16 %v1169, %v1168
    %v1238 = vpack.c.b16 %v1171, %v1170
    %v1239 = vpack.c.b16 %v1173, %v1172
    %v1240 = vpack.c.b16 %v1175, %v1174
    %v1241 = vpack.c.b16 %v1177, %v1176
    %1306 = vmatprep.subr.bf16.mxu0 0
    %1307 = vmatpush1.bf16.msra.mxu0 %v1185
    %1308 = vmatprep.subr.bf16.mxu0 0
    %1309 = vmatpush1.bf16.msra.mxu0 %v1184
    %1310 = vmatprep.subr.bf16.mxu0 0
    %1311 = vmatpush1.bf16.msra.mxu0 %v1183
    %1312 = vmatprep.subr.bf16.mxu0 0
    %1313 = vmatpush1.bf16.msra.mxu0 %v1182
    %1314 = vmatprep.subr.bf16.mxu0 0
    %1315 = vmatpush1.bf16.msra.mxu0 %v1181
    %1316 = vmatprep.subr.bf16.mxu0 0
    %1317 = vmatpush1.bf16.msra.mxu0 %v1180
    %1318 = vmatprep.subr.bf16.mxu0 0
    %1319 = vmatpush1.bf16.msra.mxu0 %v1179
    %1320 = vmatprep.subr.bf16.mxu0 0
    %1321 = vmatpush1.bf16.msra.mxu0 %v1178
    %1322 = vmatprep.subr.bf16.mxu0 0
    %1323 = vmatpush2.bf16.msra.mxu0 %v1193
    %1324 = vmatprep.subr.bf16.mxu0 0
    %1325 = vmatpush2.bf16.msra.mxu0 %v1192
    %1326 = vmatprep.subr.bf16.mxu0 0
    %1327 = vmatpush2.bf16.msra.mxu0 %v1191
    %1328 = vmatprep.subr.bf16.mxu0 0
    %1329 = vmatpush2.bf16.msra.mxu0 %v1190
    %1330 = vmatprep.subr.bf16.mxu0 0
    %1331 = vmatpush2.bf16.msra.mxu0 %v1189
    %1332 = vmatprep.subr.bf16.mxu0 0
    %1333 = vmatpush2.bf16.msra.mxu0 %v1188
    %1334 = vmatprep.subr.bf16.mxu0 0
    %1335 = vmatpush2.bf16.msra.mxu0 %v1187
    %1336 = vmatprep.subr.bf16.mxu0 0
    %1337 = vmatpush2.bf16.msra.mxu0 %v1186
    %1338 = vmatprep.mubr.bf16.mxu0 %v79
    %1339 = vmatmul.mubr.bf16.gmra.mxu0 %v72
    %v1340 = vpop.f32.mrf.mxu0
    %v1341 = vadd.f32 %v917, %v1340
    %v1342 = vpop.f32.mrf.mxu0
    %v1343 = vpop.f32.mrf.mxu0
    %v1344 = vpop.f32.mrf.mxu0
    %1345 = vdwg.mxu0
    %1346 = vmatprep.subr.bf16.mxu0 0
    %1347 = vmatpush1.bf16.msra.mxu0 %v1201
    %1348 = vmatprep.subr.bf16.mxu0 0
    %1349 = vmatpush1.bf16.msra.mxu0 %v1200
    %1350 = vmatprep.subr.bf16.mxu0 0
    %1351 = vmatpush1.bf16.msra.mxu0 %v1199
    %1352 = vmatprep.subr.bf16.mxu0 0
    %1353 = vmatpush1.bf16.msra.mxu0 %v1198
    %1354 = vmatprep.subr.bf16.mxu0 0
    %1355 = vmatpush1.bf16.msra.mxu0 %v1197
    %1356 = vmatprep.subr.bf16.mxu0 0
    %1357 = vmatpush1.bf16.msra.mxu0 %v1196
    %1358 = vmatprep.subr.bf16.mxu0 0
    %1359 = vmatpush1.bf16.msra.mxu0 %v1195
    %1360 = vmatprep.subr.bf16.mxu0 0
    %1361 = vmatpush1.bf16.msra.mxu0 %v1194
    %1362 = vmatprep.subr.bf16.mxu0 0
    %1363 = vmatpush2.bf16.msra.mxu0 %v1209
    %1364 = vmatprep.subr.bf16.mxu0 0
    %1365 = vmatpush2.bf16.msra.mxu0 %v1208
    %1366 = vmatprep.subr.bf16.mxu0 0
    %1367 = vmatpush2.bf16.msra.mxu0 %v1207
    %1368 = vmatprep.subr.bf16.mxu0 0
    %1369 = vmatpush2.bf16.msra.mxu0 %v1206
    %1370 = vmatprep.subr.bf16.mxu0 0
    %1371 = vmatpush2.bf16.msra.mxu0 %v1205
    %1372 = vmatprep.subr.bf16.mxu0 0
    %1373 = vmatpush2.bf16.msra.mxu0 %v1204
    %1374 = vmatprep.subr.bf16.mxu0 0
    %1375 = vmatpush2.bf16.msra.mxu0 %v1203
    %1376 = vmatprep.subr.bf16.mxu0 0
    %1377 = vmatpush2.bf16.msra.mxu0 %v1202
    %1378 = vmatprep.mubr.bf16.mxu0 %v93
    %1379 = vmatmul.mubr.bf16.gmra.mxu0 %v86
    %v1380 = vpop.f32.mrf.mxu0
    %v1381 = vadd.f32 %v1341, %v1380
    %v1382 = vpop.f32.mrf.mxu0
    %v1383 = vpop.f32.mrf.mxu0
    %v1384 = vpop.f32.mrf.mxu0
    %1385 = vdwg.mxu0
    %1386 = vmatprep.subr.bf16.mxu0 0
    %1387 = vmatpush1.bf16.msra.mxu0 %v1217
    %1388 = vmatprep.subr.bf16.mxu0 0
    %1389 = vmatpush1.bf16.msra.mxu0 %v1216
    %1390 = vmatprep.subr.bf16.mxu0 0
    %1391 = vmatpush1.bf16.msra.mxu0 %v1215
    %1392 = vmatprep.subr.bf16.mxu0 0
    %1393 = vmatpush1.bf16.msra.mxu0 %v1214
    %1394 = vmatprep.subr.bf16.mxu0 0
    %1395 = vmatpush1.bf16.msra.mxu0 %v1213
    %1396 = vmatprep.subr.bf16.mxu0 0
    %1397 = vmatpush1.bf16.msra.mxu0 %v1212
    %1398 = vmatprep.subr.bf16.mxu0 0
    %1399 = vmatpush1.bf16.msra.mxu0 %v1211
    %1400 = vmatprep.subr.bf16.mxu0 0
    %1401 = vmatpush1.bf16.msra.mxu0 %v1210
    %1402 = vmatprep.subr.bf16.mxu0 0
    %1403 = vmatpush2.bf16.msra.mxu0 %v1225
    %1404 = vmatprep.subr.bf16.mxu0 0
    %1405 = vmatpush2.bf16.msra.mxu0 %v1224
    %1406 = vmatprep.subr.bf16.mxu0 0
    %1407 = vmatpush2.bf16.msra.mxu0 %v1223
    %1408 = vmatprep.subr.bf16.mxu0 0
    %1409 = vmatpush2.bf16.msra.mxu0 %v1222
    %1410 = vmatprep.subr.bf16.mxu0 0
    %1411 = vmatpush2.bf16.msra.mxu0 %v1221
    %1412 = vmatprep.subr.bf16.mxu0 0
    %1413 = vmatpush2.bf16.msra.mxu0 %v1220
    %1414 = vmatprep.subr.bf16.mxu0 0
    %1415 = vmatpush2.bf16.msra.mxu0 %v1219
    %1416 = vmatprep.subr.bf16.mxu0 0
    %1417 = vmatpush2.bf16.msra.mxu0 %v1218
    %1418 = vmatprep.mubr.bf16.mxu0 %v107
    %1419 = vmatmul.mubr.bf16.gmra.mxu0 %v100
    %v1420 = vpop.f32.mrf.mxu0
    %v1421 = vadd.f32 %v1381, %v1420
    %v1422 = vpop.f32.mrf.mxu0
    %v1423 = vpop.f32.mrf.mxu0
    %v1424 = vpop.f32.mrf.mxu0
    %1425 = vdwg.mxu0
    %1426 = vmatprep.subr.bf16.mxu0 0
    %1427 = vmatpush1.bf16.msra.mxu0 %v1233
    %1428 = vmatprep.subr.bf16.mxu0 0
    %1429 = vmatpush1.bf16.msra.mxu0 %v1232
    %1430 = vmatprep.subr.bf16.mxu0 0
    %1431 = vmatpush1.bf16.msra.mxu0 %v1231
    %1432 = vmatprep.subr.bf16.mxu0 0
    %1433 = vmatpush1.bf16.msra.mxu0 %v1230
    %1434 = vmatprep.subr.bf16.mxu0 0
    %1435 = vmatpush1.bf16.msra.mxu0 %v1229
    %1436 = vmatprep.subr.bf16.mxu0 0
    %1437 = vmatpush1.bf16.msra.mxu0 %v1228
    %1438 = vmatprep.subr.bf16.mxu0 0
    %1439 = vmatpush1.bf16.msra.mxu0 %v1227
    %1440 = vmatprep.subr.bf16.mxu0 0
    %1441 = vmatpush1.bf16.msra.mxu0 %v1226
    %1442 = vmatprep.subr.bf16.mxu0 0
    %1443 = vmatpush2.bf16.msra.mxu0 %v1241
    %1444 = vmatprep.subr.bf16.mxu0 0
    %1445 = vmatpush2.bf16.msra.mxu0 %v1240
    %1446 = vmatprep.subr.bf16.mxu0 0
    %1447 = vmatpush2.bf16.msra.mxu0 %v1239
    %1448 = vmatprep.subr.bf16.mxu0 0
    %1449 = vmatpush2.bf16.msra.mxu0 %v1238
    %1450 = vmatprep.subr.bf16.mxu0 0
    %1451 = vmatpush2.bf16.msra.mxu0 %v1237
    %1452 = vmatprep.subr.bf16.mxu0 0
    %1453 = vmatpush2.bf16.msra.mxu0 %v1236
    %1454 = vmatprep.subr.bf16.mxu0 0
    %1455 = vmatpush2.bf16.msra.mxu0 %v1235
    %1456 = vmatprep.subr.bf16.mxu0 0
    %1457 = vmatpush2.bf16.msra.mxu0 %v1234
    %1458 = vmatprep.mubr.bf16.mxu0 %v121
    %1459 = vmatmul.mubr.bf16.gmra.mxu0 %v114
    %v1460 = vpop.f32.mrf.mxu0
    %v1461 = vadd.f32 %v1421, %v1460
    %v1462 = vpop.f32.mrf.mxu0
    %v1463 = vpop.f32.mrf.mxu0
    %v1464 = vpop.f32.mrf.mxu0
    %1465 = vdwg.mxu0
    %1466 = vst [vmem:[#allocation8] sm:$0x3] %v1461
    // Predicated region
    $region26: #{tpu_custom_call.1} parent=1 // pred_check
      _
    $region27: #{tpu_custom_call.1} parent=1 // pred_check_branch
      %1468 = sbr.rel (0) target = $region29
    $region28: #{tpu_custom_call.1} parent=1 // pred_region
      %s1470 = ssub.s32 32, 32
      %1471 = vsyncadd [#allocation4], %s1470
      %s1473 = sshll.u32 [#allocation8], 4
      %s1474 = int_to_ptr.vmem [resolvable:$true] %s1473
      %1476 = dma.vmem_to_hbm [thread:$0]  %s1474, 32, %s3, [#allocation4]
    $region29: #{tpu_custom_call.1} parent=1 // pred_fallthru
      _
    // Predicated region
    $region30: #{tpu_custom_call.1} parent=1 // pred_check
      _
    $region31: #{tpu_custom_call.1} parent=1 // pred_check_branch
      %1478 = sbr.rel (0) target = $region33
    $region32: #{tpu_custom_call.1} parent=1 // pred_region
      %1479 = dma.done [#allocation4], 32
    $region33: #{tpu_custom_call.1} parent=1 // pred_fallthru
      _
    %1480 = vsyncpa [#allocation3], 1
    %1481 = vsyncpa [#allocation6], 1
    %1482 = vsyncpa [#allocation4], 1

</llo_original>
